<compile_context>
chip_gen: v7x
topology: tpu7x:2x2x1
jax: 0.10.0
libtpu: 0.0.40
codegen_flags: <defaults>
</compile_context>

<pallas_src>
import jax
import jax.numpy as jnp
from jax.experimental import pallas as pl
from jax.experimental.pallas import tpu as pltpu


def _pos_embed_kernel(row_ref, col_ref, out_ref):
    # row_ref: (tH, F) block of row_embed.weight   (y_emb rows for this tile)
    # col_ref: (W,  F) full col_embed.weight        (x_emb)
    # out_ref: (tH, W, 2F) block of the output
    tH, F = row_ref.shape
    W = col_ref.shape[0]
    col = col_ref[...].astype(out_ref.dtype)   # (W, F)
    row = row_ref[...].astype(out_ref.dtype)   # (tH, F)
    # Two direct slice stores -- no concat, no in-VMEM relayout.
    out_ref[:, :, :F] = jnp.broadcast_to(col[None, :, :], (tH, W, F))
    out_ref[:, :, F:] = jnp.broadcast_to(row[:, None, :], (tH, W, F))


def _pick_tile_h(H, W, two_f, itemsize, vmem_budget_bytes):
    """Largest H-tile (H itself, or a divisor of H that is a multiple of 8)
    whose double-buffered output block fits the VMEM budget."""
    candidates = [d for d in range(H, 0, -1)
                  if H % d == 0 and (d == H or d % 8 == 0)]
    for t_h in candidates:
        if 2 * t_h * W * two_f * itemsize <= vmem_budget_bytes:
            return t_h
    return candidates[-1]


def make_position_embedding(row_weight, col_weight, *, out_dtype=None,
                            vmem_budget_bytes=8 * 1024 * 1024):
    """Compute the learned positional embedding (depends only on the weights).

    Returns an array of shape (H*W, 2F). Cache the result across forward
    passes; it does not depend on the input tensor.
    """
    H, F = row_weight.shape
    W, Fc = col_weight.shape
    assert F == Fc, (F, Fc)
    if out_dtype is None:
        out_dtype = row_weight.dtype
    itemsize = jnp.dtype(out_dtype).itemsize

    tile_h = _pick_tile_h(H, W, 2 * F, itemsize, vmem_budget_bytes)
    grid = (H // tile_h,)

    out3d = pl.pallas_call(
        _pos_embed_kernel,
        out_shape=jax.ShapeDtypeStruct((H, W, 2 * F), out_dtype),
        grid=grid,
        in_specs=[
            pl.BlockSpec((tile_h, F), lambda h: (h, 0)),   # row_embed tile
            pl.BlockSpec((W, F), lambda h: (0, 0)),        # full col_embed
        ],
        out_specs=pl.BlockSpec((tile_h, W, 2 * F), lambda h: (h, 0, 0)),
        compiler_params=pltpu.CompilerParams(
            dimension_semantics=("parallel",)),
    )(row_weight, col_weight)

    # Contiguous leading-dim merge: free metadata reshape, index (h*W + w)
    # matches torch's .flatten(0, 1).
    return out3d.reshape(H * W, 2 * F)


def position_embedding_learned(tensor, row_weight, col_weight, out_dtype=None):
    # `tensor` is NCHW like the PyTorch module but its values are unused
    # (only its device matters in the reference implementation).
    del tensor
    return make_position_embedding(row_weight, col_weight, out_dtype=out_dtype)


if __name__ == "__main__":
    key = jax.random.PRNGKey(0)
    feature_size = (16, 16)      # (H, W)
    num_pos_feats = 32

    k_row, k_col, k_x = jax.random.split(key, 3)
    # nn.init.uniform_ -> U[0, 1); deterministic synthetic weights.
    row_weight = jax.random.uniform(
        k_row, (feature_size[0], num_pos_feats), jnp.float32)
    col_weight = jax.random.uniform(
        k_col, (feature_size[1], num_pos_feats), jnp.float32)

    # Example input tensor (NCHW); values unused (API parity with the module).
    x = jax.random.normal(
        k_x, (2, 4, feature_size[0], feature_size[1]), jnp.float32)

    # Pure-JAX reference (mirrors the torch.cat construction).
    H, W, F = feature_size[0], feature_size[1], num_pos_feats
    ref = jnp.concatenate(
        [jnp.broadcast_to(col_weight[None, :, :], (H, W, F)),
         jnp.broadcast_to(row_weight[:, None, :], (H, W, F))],
        axis=-1,
    ).reshape(H * W, 2 * F)

    # 1) Default path: single block, f32 (module semantics).
    pos = position_embedding_learned(x, row_weight, col_weight)
    pos = jax.block_until_ready(pos)
    assert pos.shape == (H * W, 2 * F), pos.shape
    assert pos.dtype == jnp.float32
    assert jnp.allclose(pos, ref), "f32 single-block mismatch vs reference"

    # 2) Gridded path (what a large problem would use on v7x): force a tiny
    #    VMEM budget so the H axis is tiled; result must be identical.
    pos_tiled = make_position_embedding(row_weight, col_weight,
                                        vmem_budget_bytes=64 * 1024)
    pos_tiled = jax.block_until_ready(pos_tiled)
    assert jnp.allclose(pos_tiled, ref), "gridded path mismatch vs reference"

    # 3) Consumer-dtype (bf16) emission in-kernel (halves store bytes).
    pos_bf16 = position_embedding_learned(x, row_weight, col_weight,
                                          out_dtype=jnp.bfloat16)
    pos_bf16 = jax.block_until_ready(pos_bf16)
    assert pos_bf16.dtype == jnp.bfloat16
    assert jnp.allclose(pos_bf16.astype(jnp.float32), ref,
                        atol=1e-2, rtol=1e-2)

    print("KERNEL_OK")
</pallas_src>

<mosaic_0001>
module attributes {stable_mosaic.version = 11 : i64} {
  func.func @_pos_embed_kernel(%arg0: i32, %arg1: memref<16x32xf32, #tpu.memory_space<vmem>>, %arg2: memref<16x32xf32, #tpu.memory_space<vmem>>, %arg3: memref<16x16x64xf32, #tpu.memory_space<vmem>>) attributes {dimension_semantics = [#tpu.dimension_semantics<parallel>], iteration_bounds = array<i64: 1>, scalar_prefetch = 0 : i64, scratch_operands = 0 : i64, tpu.core_type = #tpu.core_type<tc>, window_params = [{transform_indices = @transform_0, window_bounds = array<i64: 16, 32>}, {pipeline_mode = #tpu.pipeline_mode<synchronous>, transform_indices = @transform_1, window_bounds = array<i64: 16, 32>}, {transform_indices = @transform_2, window_bounds = array<i64: 16, 16, 64>}]} {
    %c0 = arith.constant 0 : index
    %c0_0 = arith.constant 0 : index
    %0 = vector.load %arg2[%c0, %c0_0] : memref<16x32xf32, #tpu.memory_space<vmem>>, vector<16x32xf32>
    %c0_1 = arith.constant 0 : index
    %c0_2 = arith.constant 0 : index
    %1 = vector.load %arg1[%c0_1, %c0_2] : memref<16x32xf32, #tpu.memory_space<vmem>>, vector<16x32xf32>
    %2 = vector.shape_cast %0 : vector<16x32xf32> to vector<1x16x32xf32>
    %3 = vector.shape_cast %2 : vector<1x16x32xf32> to vector<1x16x32xf32>
    %4 = vector.broadcast %3 : vector<1x16x32xf32> to vector<16x16x32xf32>
    %c0_3 = arith.constant 0 : index
    %c0_4 = arith.constant 0 : index
    %c0_5 = arith.constant 0 : index
    %5 = vector.load %arg3[%c0_3, %c0_4, %c0_5] : memref<16x16x64xf32, #tpu.memory_space<vmem>>, vector<16x16x32xf32>
    tpu.vector_store %arg3[%c0_3, %c0_4, %c0_5], %4 {strides = array<i32>} : memref<16x16x64xf32, #tpu.memory_space<vmem>>, vector<16x16x32xf32>,
    %6 = vector.shape_cast %1 : vector<16x32xf32> to vector<16x1x32xf32>
    %7 = vector.shape_cast %6 : vector<16x1x32xf32> to vector<16x1x32xf32>
    %8 = vector.broadcast %7 : vector<16x1x32xf32> to vector<16x16x32xf32>
    %c0_6 = arith.constant 0 : index
    %c0_7 = arith.constant 0 : index
    %c32 = arith.constant 32 : index
    %9 = vector.load %arg3[%c0_6, %c0_7, %c32] : memref<16x16x64xf32, #tpu.memory_space<vmem>>, vector<16x16x32xf32>
    tpu.vector_store %arg3[%c0_6, %c0_7, %c32], %8 {strides = array<i32>} : memref<16x16x64xf32, #tpu.memory_space<vmem>>, vector<16x16x32xf32>,
    return
  }
  func.func @transform_0(%arg0: i32) -> (i32, i32) {
    %c0_i32 = arith.constant 0 : i32
    %c0_i32_0 = arith.constant 0 : i32
    return %arg0, %c0_i32 : i32, i32
  }
  func.func @transform_1(%arg0: i32) -> (i32, i32) {
    %c0_i32 = arith.constant 0 : i32
    %c0_i32_0 = arith.constant 0 : i32
    %c0_i32_1 = arith.constant 0 : i32
    return %c0_i32, %c0_i32_0 : i32, i32
  }
  func.func @transform_2(%arg0: i32) -> (i32, i32, i32) {
    %c0_i32 = arith.constant 0 : i32
    %c0_i32_0 = arith.constant 0 : i32
    %c0_i32_1 = arith.constant 0 : i32
    return %arg0, %c0_i32, %c0_i32_0 : i32, i32, i32
  }
}

</mosaic_0001>

<llo_original>
// kernel: tpu_custom_call.1
$region0: #{tpu_custom_call.1}
  #allocation0 [shape = 'u32[]', space=smem, size = 0x4, offset = 0x4, fixed_abs, tag = 'smem constant byte address 0x4 - core index']
  #allocation1 [shape = 'u32[144,128]{1,0:T(1,128)}', space=vmem, size = 0x12000, scoped, tag = 'internal scratch']
  %s0 = inlined_call_operand.hbm [shape: f32[16,32], index: 0, kind: input, shape index: {}]
  %s1 = inlined_call_operand.hbm [shape: f32[16,32], index: 1, kind: input, shape index: {}]
  %s2 = inlined_call_operand.hbm [shape: f32[16,16,64], index: 2, kind: output, shape index: {}]
  %s3 = sld [smem:[#allocation0]]
  $region26: #{tpu_custom_call.1} parent=0
    _
  %s5 = ssub.s32 1, %s3
  %s6 = scalar_select 0, %s5, %s3
  $region1: #{tpu_custom_call.1} parent=0
    #allocation2 [shape = 'u8[8192]{0}', space=vmem, size = 0x2000, scoped, tag = 'input window, operand 0, single buffered']
    #allocation3 [shape = 's32[1]{0}', space=sflag, size = 0x4, scoped, tag = 'scoped memory for tpu_custom_call.1']
    #allocation4 [shape = 's32[1]{0}', space=sflag, size = 0x4, scoped, tag = 'scoped memory for tpu_custom_call.1']
    #allocation5 [shape = 'u8[8192]{0}', space=vmem, size = 0x2000, scoped, tag = 'input window, operand 1, single buffered']
    #allocation6 [shape = 's32[1]{0}', space=sflag, size = 0x4, scoped, tag = 'scoped memory for tpu_custom_call.1']
    #allocation7 [shape = 'u8[131072]{0}', space=vmem, size = 0x20000, scoped, tag = 'output window, operand 0, single buffered']
    %7 = vsyncpa [#allocation3], 0
    %8 = vsyncpa [#allocation6], 0
    %9 = vsyncpa [#allocation4], 0
    // Predicated region
    $region2: #{tpu_custom_call.1} parent=1 // pred_check
      _
    $region3: #{tpu_custom_call.1} parent=1 // pred_check_branch
      %11 = sbr.rel (0) target = $region5
    $region4: #{tpu_custom_call.1} parent=1 // pred_region
      %s13 = ssub.s32 256, 256
      %14 = vsyncadd [#allocation3], %s13
      %s15 = sshll.u32 [#allocation2], 4
      %s16 = int_to_ptr.vmem [resolvable:$true] %s15
      %21 = dma.hbm_to_vmem [thread:$0]  %s0, 256, %s16, [#allocation3], 128, 128, 8
    $region5: #{tpu_custom_call.1} parent=1 // pred_fallthru
      _
    // Predicated region
    $region6: #{tpu_custom_call.1} parent=1 // pred_check
      _
    $region7: #{tpu_custom_call.1} parent=1 // pred_check_branch
      %23 = sbr.rel (0) target = $region9
    $region8: #{tpu_custom_call.1} parent=1 // pred_region
      %s25 = ssub.s32 256, 256
      %26 = vsyncadd [#allocation6], %s25
      %s27 = sshll.u32 [#allocation5], 4
      %s28 = int_to_ptr.vmem [resolvable:$true] %s27
      %33 = dma.hbm_to_vmem [thread:$0]  %s1, 256, %s28, [#allocation6], 128, 128, 8
    $region9: #{tpu_custom_call.1} parent=1 // pred_fallthru
      _
    // Predicated region
    $region10: #{tpu_custom_call.1} parent=1 // pred_check
      _
    $region11: #{tpu_custom_call.1} parent=1 // pred_check_branch
      %35 = sbr.rel (0) target = $region13
    $region12: #{tpu_custom_call.1} parent=1 // pred_region
      %36 = dma.done [#allocation3], 256
    $region13: #{tpu_custom_call.1} parent=1 // pred_fallthru
      _
    // Predicated region
    $region14: #{tpu_custom_call.1} parent=1 // pred_check
      _
    $region15: #{tpu_custom_call.1} parent=1 // pred_check_branch
      %38 = sbr.rel (0) target = $region17
    $region16: #{tpu_custom_call.1} parent=1 // pred_region
      %39 = dma.done [#allocation6], 256
    $region17: #{tpu_custom_call.1} parent=1 // pred_fallthru
      _
    %v40 = vld [vmem:[#allocation5] sm:$0xff]
    %v41 = vld [vmem:[#allocation5 + $0x8] sm:$0xff]
    %v42 = vld [vmem:[#allocation2] sm:$0xff]
    %v43 = vld [vmem:[#allocation2 + $0x8] sm:$0xff]
    %vm44 = vcmask 261120
    %45 = vst.msk [vmem:[#allocation7] sm:$0xff] %vm44, %v40
    %46 = vst.msk [vmem:[#allocation7 + $0x8] sm:$0xff] %vm44, %v41
    %47 = vst.msk [vmem:[#allocation7 + $0x10] sm:$0xff] %vm44, %v40
    %48 = vst.msk [vmem:[#allocation7 + $0x18] sm:$0xff] %vm44, %v41
    %49 = vst.msk [vmem:[#allocation7 + $0x20] sm:$0xff] %vm44, %v40
    %50 = vst.msk [vmem:[#allocation7 + $0x28] sm:$0xff] %vm44, %v41
    %51 = vst.msk [vmem:[#allocation7 + $0x30] sm:$0xff] %vm44, %v40
    %52 = vst.msk [vmem:[#allocation7 + $0x38] sm:$0xff] %vm44, %v41
    %53 = vst.msk [vmem:[#allocation7 + $0x40] sm:$0xff] %vm44, %v40
    %54 = vst.msk [vmem:[#allocation7 + $0x48] sm:$0xff] %vm44, %v41
    %55 = vst.msk [vmem:[#allocation7 + $0x50] sm:$0xff] %vm44, %v40
    %56 = vst.msk [vmem:[#allocation7 + $0x58] sm:$0xff] %vm44, %v41
    %57 = vst.msk [vmem:[#allocation7 + $0x60] sm:$0xff] %vm44, %v40
    %58 = vst.msk [vmem:[#allocation7 + $0x68] sm:$0xff] %vm44, %v41
    %59 = vst.msk [vmem:[#allocation7 + $0x70] sm:$0xff] %vm44, %v40
    %60 = vst.msk [vmem:[#allocation7 + $0x78] sm:$0xff] %vm44, %v41
    %61 = vst.msk [vmem:[#allocation7 + $0x80] sm:$0xff] %vm44, %v40
    %62 = vst.msk [vmem:[#allocation7 + $0x88] sm:$0xff] %vm44, %v41
    %63 = vst.msk [vmem:[#allocation7 + $0x90] sm:$0xff] %vm44, %v40
    %64 = vst.msk [vmem:[#allocation7 + $0x98] sm:$0xff] %vm44, %v41
    %65 = vst.msk [vmem:[#allocation7 + $0xa0] sm:$0xff] %vm44, %v40
    %66 = vst.msk [vmem:[#allocation7 + $0xa8] sm:$0xff] %vm44, %v41
    %67 = vst.msk [vmem:[#allocation7 + $0xb0] sm:$0xff] %vm44, %v40
    %68 = vst.msk [vmem:[#allocation7 + $0xb8] sm:$0xff] %vm44, %v41
    %69 = vst.msk [vmem:[#allocation7 + $0xc0] sm:$0xff] %vm44, %v40
    %70 = vst.msk [vmem:[#allocation7 + $0xc8] sm:$0xff] %vm44, %v41
    %71 = vst.msk [vmem:[#allocation7 + $0xd0] sm:$0xff] %vm44, %v40
    %72 = vst.msk [vmem:[#allocation7 + $0xd8] sm:$0xff] %vm44, %v41
    %73 = vst.msk [vmem:[#allocation7 + $0xe0] sm:$0xff] %vm44, %v40
    %74 = vst.msk [vmem:[#allocation7 + $0xe8] sm:$0xff] %vm44, %v41
    %75 = vst.msk [vmem:[#allocation7 + $0xf0] sm:$0xff] %vm44, %v40
    %76 = vst.msk [vmem:[#allocation7 + $0xf8] sm:$0xff] %vm44, %v41
    %v79 = vcombine.high %v42, %v42
    %v81 = vunpack.c.l.s4 1966171168
    %v82 = vunpack.c.0.s8 %v81
    %v83 = vlaneseq
    %v84 = vshrl.u32 %v83, 7
    %v85 = vsub.s32 %v82, %v84
    %v86 = vrot.slane %v42, %v85
    %v88 = vunpack.c.l.s4 1966171168
    %v89 = vunpack.c.0.s8 %v88
    %v90 = vlaneseq
    %v91 = vshrl.u32 %v90, 7
    %v92 = vsub.s32 %v89, %v91
    %v93 = vrot.slane %v79, %v92
    %v94 = vcombine.high %v86, %v86
    %v95 = vcombine.high %v93, %v93
    %v97 = vunpack.c.l.s4 1966171168
    %v98 = vunpack.c.0.s8 %v97
    %v99 = vlaneseq
    %v100 = vshrl.u32 %v99, 7
    %v101 = vsub.s32 %v98, %v100
    %v102 = vrot.slane %v86, %v101
    %v104 = vunpack.c.l.s4 1966171168
    %v105 = vunpack.c.0.s8 %v104
    %v106 = vlaneseq
    %v107 = vshrl.u32 %v106, 7
    %v108 = vsub.s32 %v105, %v107
    %v109 = vrot.slane %v93, %v108
    %v111 = vunpack.c.l.s4 1966171168
    %v112 = vunpack.c.0.s8 %v111
    %v113 = vlaneseq
    %v114 = vshrl.u32 %v113, 7
    %v115 = vsub.s32 %v112, %v114
    %v116 = vrot.slane %v94, %v115
    %v118 = vunpack.c.l.s4 1966171168
    %v119 = vunpack.c.0.s8 %v118
    %v120 = vlaneseq
    %v121 = vshrl.u32 %v120, 7
    %v122 = vsub.s32 %v119, %v121
    %v123 = vrot.slane %v95, %v122
    %v124 = vcombine.high %v102, %v102
    %v125 = vcombine.high %v109, %v109
    %v126 = vcombine.high %v116, %v116
    %v127 = vcombine.high %v123, %v123
    %v128 = vcombine.high %v43, %v43
    %v130 = vunpack.c.l.s4 1966171168
    %v131 = vunpack.c.0.s8 %v130
    %v132 = vlaneseq
    %v133 = vshrl.u32 %v132, 7
    %v134 = vsub.s32 %v131, %v133
    %v135 = vrot.slane %v43, %v134
    %v137 = vunpack.c.l.s4 1966171168
    %v138 = vunpack.c.0.s8 %v137
    %v139 = vlaneseq
    %v140 = vshrl.u32 %v139, 7
    %v141 = vsub.s32 %v138, %v140
    %v142 = vrot.slane %v128, %v141
    %v143 = vcombine.high %v135, %v135
    %v144 = vcombine.high %v142, %v142
    %v146 = vunpack.c.l.s4 1966171168
    %v147 = vunpack.c.0.s8 %v146
    %v148 = vlaneseq
    %v149 = vshrl.u32 %v148, 7
    %v150 = vsub.s32 %v147, %v149
    %v151 = vrot.slane %v135, %v150
    %v153 = vunpack.c.l.s4 1966171168
    %v154 = vunpack.c.0.s8 %v153
    %v155 = vlaneseq
    %v156 = vshrl.u32 %v155, 7
    %v157 = vsub.s32 %v154, %v156
    %v158 = vrot.slane %v142, %v157
    %v160 = vunpack.c.l.s4 1966171168
    %v161 = vunpack.c.0.s8 %v160
    %v162 = vlaneseq
    %v163 = vshrl.u32 %v162, 7
    %v164 = vsub.s32 %v161, %v163
    %v165 = vrot.slane %v143, %v164
    %v167 = vunpack.c.l.s4 1966171168
    %v168 = vunpack.c.0.s8 %v167
    %v169 = vlaneseq
    %v170 = vshrl.u32 %v169, 7
    %v171 = vsub.s32 %v168, %v170
    %v172 = vrot.slane %v144, %v171
    %v173 = vcombine.high %v151, %v151
    %v174 = vcombine.high %v158, %v158
    %v175 = vcombine.high %v165, %v165
    %v176 = vcombine.high %v172, %v172
    %v177 = vlaneseq
    %v178 = vshrl.u32 %v177, 7
    %v179 = vsub.s32 0, %v178
    %v180 = vrot.slane %v102, %v179
    %v181 = vlaneseq
    %v182 = vshrl.u32 %v181, 7
    %v183 = vsub.s32 0, %v182
    %v184 = vrot.slane %v116, %v183
    %v185 = vlaneseq
    %v186 = vshrl.u32 %v185, 7
    %v187 = vsub.s32 0, %v186
    %v188 = vrot.slane %v124, %v187
    %v189 = vlaneseq
    %v190 = vshrl.u32 %v189, 7
    %v191 = vsub.s32 0, %v190
    %v192 = vrot.slane %v126, %v191
    %v193 = vlaneseq
    %v194 = vshrl.u32 %v193, 7
    %v195 = vsub.s32 0, %v194
    %v196 = vrot.slane %v109, %v195
    %v197 = vlaneseq
    %v198 = vshrl.u32 %v197, 7
    %v199 = vsub.s32 0, %v198
    %v200 = vrot.slane %v123, %v199
    %v201 = vlaneseq
    %v202 = vshrl.u32 %v201, 7
    %v203 = vsub.s32 0, %v202
    %v204 = vrot.slane %v125, %v203
    %v205 = vlaneseq
    %v206 = vshrl.u32 %v205, 7
    %v207 = vsub.s32 0, %v206
    %v208 = vrot.slane %v127, %v207
    %v209 = vlaneseq
    %v210 = vshrl.u32 %v209, 7
    %v211 = vsub.s32 0, %v210
    %v212 = vrot.slane %v151, %v211
    %v213 = vlaneseq
    %v214 = vshrl.u32 %v213, 7
    %v215 = vsub.s32 0, %v214
    %v216 = vrot.slane %v165, %v215
    %v217 = vlaneseq
    %v218 = vshrl.u32 %v217, 7
    %v219 = vsub.s32 0, %v218
    %v220 = vrot.slane %v173, %v219
    %v221 = vlaneseq
    %v222 = vshrl.u32 %v221, 7
    %v223 = vsub.s32 0, %v222
    %v224 = vrot.slane %v175, %v223
    %v225 = vlaneseq
    %v226 = vshrl.u32 %v225, 7
    %v227 = vsub.s32 0, %v226
    %v228 = vrot.slane %v158, %v227
    %v229 = vlaneseq
    %v230 = vshrl.u32 %v229, 7
    %v231 = vsub.s32 0, %v230
    %v232 = vrot.slane %v172, %v231
    %v233 = vlaneseq
    %v234 = vshrl.u32 %v233, 7
    %v235 = vsub.s32 0, %v234
    %v236 = vrot.slane %v174, %v235
    %v237 = vlaneseq
    %v238 = vshrl.u32 %v237, 7
    %v239 = vsub.s32 0, %v238
    %v240 = vrot.slane %v176, %v239
    %241 = vrot.lane.b32.xlu0 %v180, 32
    %v242 = vpop.permute.xlu0 %241
    %243 = vrot.lane.b32.xlu0 %v184, 32
    %v244 = vpop.permute.xlu0 %243
    %245 = vrot.lane.b32.xlu0 %v188, 32
    %v246 = vpop.permute.xlu0 %245
    %247 = vrot.lane.b32.xlu0 %v192, 32
    %v248 = vpop.permute.xlu0 %247
    %249 = vrot.lane.b32.xlu0 %v196, 32
    %v250 = vpop.permute.xlu0 %249
    %251 = vrot.lane.b32.xlu0 %v200, 32
    %v252 = vpop.permute.xlu0 %251
    %253 = vrot.lane.b32.xlu0 %v204, 32
    %v254 = vpop.permute.xlu0 %253
    %255 = vrot.lane.b32.xlu0 %v208, 32
    %v256 = vpop.permute.xlu0 %255
    %257 = vrot.lane.b32.xlu0 %v212, 32
    %v258 = vpop.permute.xlu0 %257
    %259 = vrot.lane.b32.xlu0 %v216, 32
    %v260 = vpop.permute.xlu0 %259
    %261 = vrot.lane.b32.xlu0 %v220, 32
    %v262 = vpop.permute.xlu0 %261
    %263 = vrot.lane.b32.xlu0 %v224, 32
    %v264 = vpop.permute.xlu0 %263
    %265 = vrot.lane.b32.xlu0 %v228, 32
    %v266 = vpop.permute.xlu0 %265
    %267 = vrot.lane.b32.xlu0 %v232, 32
    %v268 = vpop.permute.xlu0 %267
    %269 = vrot.lane.b32.xlu0 %v236, 32
    %v270 = vpop.permute.xlu0 %269
    %271 = vrot.lane.b32.xlu0 %v240, 32
    %v272 = vpop.permute.xlu0 %271
    %vm289 = vcmask 523520
    %290 = vst.msk [vmem:[#allocation7] sm:$0xff] %vm289, %v242
    %291 = vst.msk [vmem:[#allocation7 + $0x8] sm:$0xff] %vm289, %v242
    %292 = vst.msk [vmem:[#allocation7 + $0x10] sm:$0xff] %vm289, %v244
    %293 = vst.msk [vmem:[#allocation7 + $0x18] sm:$0xff] %vm289, %v244
    %294 = vst.msk [vmem:[#allocation7 + $0x20] sm:$0xff] %vm289, %v246
    %295 = vst.msk [vmem:[#allocation7 + $0x28] sm:$0xff] %vm289, %v246
    %296 = vst.msk [vmem:[#allocation7 + $0x30] sm:$0xff] %vm289, %v248
    %297 = vst.msk [vmem:[#allocation7 + $0x38] sm:$0xff] %vm289, %v248
    %298 = vst.msk [vmem:[#allocation7 + $0x40] sm:$0xff] %vm289, %v250
    %299 = vst.msk [vmem:[#allocation7 + $0x48] sm:$0xff] %vm289, %v250
    %300 = vst.msk [vmem:[#allocation7 + $0x50] sm:$0xff] %vm289, %v252
    %301 = vst.msk [vmem:[#allocation7 + $0x58] sm:$0xff] %vm289, %v252
    %302 = vst.msk [vmem:[#allocation7 + $0x60] sm:$0xff] %vm289, %v254
    %303 = vst.msk [vmem:[#allocation7 + $0x68] sm:$0xff] %vm289, %v254
    %304 = vst.msk [vmem:[#allocation7 + $0x70] sm:$0xff] %vm289, %v256
    %305 = vst.msk [vmem:[#allocation7 + $0x78] sm:$0xff] %vm289, %v256
    %306 = vst.msk [vmem:[#allocation7 + $0x80] sm:$0xff] %vm289, %v258
    %307 = vst.msk [vmem:[#allocation7 + $0x88] sm:$0xff] %vm289, %v258
    %308 = vst.msk [vmem:[#allocation7 + $0x90] sm:$0xff] %vm289, %v260
    %309 = vst.msk [vmem:[#allocation7 + $0x98] sm:$0xff] %vm289, %v260
    %310 = vst.msk [vmem:[#allocation7 + $0xa0] sm:$0xff] %vm289, %v262
    %311 = vst.msk [vmem:[#allocation7 + $0xa8] sm:$0xff] %vm289, %v262
    %312 = vst.msk [vmem:[#allocation7 + $0xb0] sm:$0xff] %vm289, %v264
    %313 = vst.msk [vmem:[#allocation7 + $0xb8] sm:$0xff] %vm289, %v264
    %314 = vst.msk [vmem:[#allocation7 + $0xc0] sm:$0xff] %vm289, %v266
    %315 = vst.msk [vmem:[#allocation7 + $0xc8] sm:$0xff] %vm289, %v266
    %316 = vst.msk [vmem:[#allocation7 + $0xd0] sm:$0xff] %vm289, %v268
    %317 = vst.msk [vmem:[#allocation7 + $0xd8] sm:$0xff] %vm289, %v268
    %318 = vst.msk [vmem:[#allocation7 + $0xe0] sm:$0xff] %vm289, %v270
    %319 = vst.msk [vmem:[#allocation7 + $0xe8] sm:$0xff] %vm289, %v270
    %320 = vst.msk [vmem:[#allocation7 + $0xf0] sm:$0xff] %vm289, %v272
    %321 = vst.msk [vmem:[#allocation7 + $0xf8] sm:$0xff] %vm289, %v272
    // Predicated region
    $region18: #{tpu_custom_call.1} parent=1 // pred_check
      _
    $region19: #{tpu_custom_call.1} parent=1 // pred_check_branch
      %323 = sbr.rel (0) target = $region21
    $region20: #{tpu_custom_call.1} parent=1 // pred_region
      %s325 = ssub.s32 4096, 4096
      %326 = vsyncadd [#allocation4], %s325
      %s327 = sshll.u32 [#allocation7], 4
      %s328 = int_to_ptr.vmem [resolvable:$true] %s327
      %333 = dma.vmem_to_hbm [thread:$0]  %s328, 4096, %s2, [#allocation4], 128, 128, 8
    $region21: #{tpu_custom_call.1} parent=1 // pred_fallthru
      _
    // Predicated region
    $region22: #{tpu_custom_call.1} parent=1 // pred_check
      _
    $region23: #{tpu_custom_call.1} parent=1 // pred_check_branch
      %335 = sbr.rel (0) target = $region25
    $region24: #{tpu_custom_call.1} parent=1 // pred_region
      %336 = dma.done [#allocation4], 4096
    $region25: #{tpu_custom_call.1} parent=1 // pred_fallthru
      _
    %337 = vsyncpa [#allocation3], 1
    %338 = vsyncpa [#allocation6], 1
    %339 = vsyncpa [#allocation4], 1

</llo_original>
